<compile_context>
chip_gen: v7x
topology: tpu7x:2x2x1
jax: 0.10.0
libtpu: 0.0.40
codegen_flags: <defaults>
</compile_context>

<pallas_src>
import numpy as np
import jax
import jax.numpy as jnp
from jax.experimental import pallas as pl
from jax.experimental.pallas import tpu as pltpu

EPS = 1e-5


def _round_up(a, b):
    return (a + b - 1) // b * b


def conv_bn_forward(x_nchw, weight, bias, gamma, beta):
    """Fused Conv2d(3x3, pad=1) -> ReLU -> BatchNorm2d (training-mode stats).

    x_nchw: (N, Cin, H, W); weight: (Cout, Cin, 3, 3); bias/gamma/beta: (Cout,).
    Returns (N, Cout, H, W) float32.
    """
    n, cin, h, w = x_nchw.shape
    cout = weight.shape[0]

    wp = w + 2                        # padded row pitch
    l_cols = h * wp                   # matmul columns (pitch-Wp output layout)
    max_shift = 2 * wp + 2            # largest tap shift (kh = kw = 2)
    flat_valid = (h + 2) * wp         # real flattened halo length
    flat_len = _round_up(max_shift + l_cols, 128)   # lane-dense input rows
    k = 9 * cin                       # contraction before padding
    k_pad = _round_up(k + 1, 16)      # taps + bias row, padded to bf16 tile
    hw = h * w

    # ---- plain-JAX glue: ONE pass over the input (pad + flatten + cast) ----
    x_pad = jnp.pad(x_nchw.astype(jnp.float32), ((0, 0), (0, 0), (1, 1), (1, 1)))
    x_flat = x_pad.reshape(n, cin, flat_valid)
    x_flat = jnp.pad(x_flat, ((0, 0), (0, 0), (0, flat_len - flat_valid)))
    x_flat = x_flat.astype(jnp.bfloat16)             # (N, Cin, flat_len)

    # Weights: (Cout,Cin,3,3) -> columns ordered (kh*3+kw)*Cin + c, then a bias
    # column (matched by an in-kernel ones row) and zero K-padding columns.
    w_k = jnp.transpose(weight.astype(jnp.float32), (0, 2, 3, 1)).reshape(cout, k)
    w_mat = jnp.concatenate(
        [w_k,
         bias.astype(jnp.float32).reshape(cout, 1),
         jnp.zeros((cout, k_pad - k - 1), jnp.float32)],
        axis=1,
    ).astype(jnp.bfloat16)                            # (Cout, k_pad)

    gamma3 = gamma.astype(jnp.float32).reshape(1, cout, 1)
    beta3 = beta.astype(jnp.float32).reshape(1, cout, 1)

    def kernel(x_ref, w_ref, gamma_ref, beta_ref, o_ref, patch_ref):
        n_i = pl.program_id(0)

        # One-time zero of the patch scratch so the zero-weight K-padding rows
        # can never meet NaN garbage (0 * NaN would poison the accumulator).
        @pl.when(n_i == 0)
        def _():
            patch_ref[...] = jnp.zeros_like(patch_ref)

        # --- in-kernel im2col from the flat halo tile -----------------------
        # Output column q = i*wp + j; tap (kh,kw) reads flat index q + kh*wp+kw
        # -> each tap is a contiguous lane slice of the halo row.  The patch
        # scratch is f32 (robust masked 32-bit sublane stores); it is cast to
        # bf16 only at the MXU boundary.
        for t in range(9):
            kh, kw = t // 3, t % 3
            s = kh * wp + kw
            patch_ref[pl.ds(t * cin, cin), :] = (
                x_ref[0, :, s:s + l_cols].astype(jnp.float32))
        # Bias row (the folded conv bias lives in weight column k).
        patch_ref[pl.ds(k, 1), :] = jnp.ones((1, l_cols), jnp.float32)

        # --- single MXU push, bf16 operands, f32 accumulation ---------------
        y = jnp.dot(w_ref[...], patch_ref[...].astype(jnp.bfloat16),
                    preferred_element_type=jnp.float32)        # (Cout, l_cols)
        y = jnp.maximum(y, 0.0)                                # ReLU (bias folded)

        # --- compact pitch (W+2) -> W and stash raw activations -------------
        # The output block is VMEM-resident across the whole grid and doubles
        # as the BatchNorm phase-1 buffer.
        for i in range(h):
            o_ref[n_i, :, pl.ds(i * w, w)] = y[:, i * wp:i * wp + w]

        # --- finalize: two-pass batch-norm over the resident activations ----
        @pl.when(n_i == pl.num_programs(0) - 1)
        def _():
            yb = o_ref[...]                                    # (N, Cout, H*W) f32
            cnt = jnp.float32(n * hw)
            s1 = jnp.sum(jnp.sum(yb, axis=2, keepdims=True), axis=0, keepdims=True)
            mean = s1 / cnt                                    # (1, Cout, 1)
            d = yb - mean
            s2 = jnp.sum(jnp.sum(d * d, axis=2, keepdims=True), axis=0, keepdims=True)
            inv_std = jax.lax.rsqrt(s2 / cnt + EPS)            # biased var, eps=1e-5
            scale = gamma_ref[...] * inv_std
            shift = beta_ref[...] - mean * scale
            o_ref[...] = yb * scale + shift

    out = pl.pallas_call(
        kernel,
        out_shape=jax.ShapeDtypeStruct((n, cout, hw), jnp.float32),
        grid=(n,),
        in_specs=[
            pl.BlockSpec((1, cin, flat_len), lambda i: (i, 0, 0)),   # halo rows
            pl.BlockSpec((cout, k_pad), lambda i: (0, 0)),           # weights (resident)
            pl.BlockSpec((1, cout, 1), lambda i: (0, 0, 0)),         # gamma
            pl.BlockSpec((1, cout, 1), lambda i: (0, 0, 0)),         # beta
        ],
        out_specs=pl.BlockSpec((n, cout, hw), lambda i: (0, 0, 0)),  # resident accumulator
        scratch_shapes=[pltpu.VMEM((k_pad, l_cols), jnp.float32)],
        compiler_params=pltpu.CompilerParams(
            dimension_semantics=("arbitrary",),
            vmem_limit_bytes=32 * 1024 * 1024,
        ),
    )(x_flat, w_mat, gamma3, beta3)

    # (N, Cout, H*W) -> (N, Cout, H, W): pure metadata reshape (no transpose).
    return out.reshape(n, cout, h, w)


def reference_forward(x_nchw, weight, bias, gamma, beta):
    """Pure-JAX f32 reference matching PyTorch conv_bn.forward (training-mode BN)."""
    y = jax.lax.conv_general_dilated(
        x_nchw.astype(jnp.float32),
        weight.astype(jnp.float32),
        window_strides=(1, 1),
        padding=((1, 1), (1, 1)),
        dimension_numbers=("NCHW", "OIHW", "NCHW"),
    )
    y = y + bias[None, :, None, None]
    y = jnp.maximum(y, 0.0)
    mean = jnp.mean(y, axis=(0, 2, 3), keepdims=True)
    var = jnp.var(y, axis=(0, 2, 3), keepdims=True)  # biased, like PyTorch BN
    y_hat = (y - mean) * jax.lax.rsqrt(var + EPS)
    return gamma[None, :, None, None] * y_hat + beta[None, :, None, None]


if __name__ == "__main__":
    # Small shapes implied by the module: NCHW input, in_ch=4, out_ch=8.
    N, IN_CH, OUT_CH, H, W = 2, 4, 8, 16, 16

    key = jax.random.PRNGKey(0)
    kx, kw, kb = jax.random.split(key, 3)

    x = jax.random.normal(kx, (N, IN_CH, H, W), dtype=jnp.float32)

    # Deterministic parameter init (shapes from nn.Conv2d / nn.BatchNorm2d):
    fan_in = IN_CH * 3 * 3
    bound = 1.0 / np.sqrt(fan_in)
    weight = jax.random.uniform(
        kw, (OUT_CH, IN_CH, 3, 3), minval=-bound, maxval=bound, dtype=jnp.float32
    )
    bias = jax.random.uniform(
        kb, (OUT_CH,), minval=-bound, maxval=bound, dtype=jnp.float32
    )
    gamma = jnp.ones((OUT_CH,), dtype=jnp.float32)   # BatchNorm2d default weight
    beta = jnp.zeros((OUT_CH,), dtype=jnp.float32)   # BatchNorm2d default bias

    out = conv_bn_forward(x, weight, bias, gamma, beta)
    out = jax.block_until_ready(out)

    ref = jax.block_until_ready(reference_forward(x, weight, bias, gamma, beta))
    assert out.shape == (N, OUT_CH, H, W), out.shape
    # bf16 MXU operands / folded bf16 bias (f32 accumulation) -> slightly
    # looser tolerance than the pure-f32 reference.
    np.testing.assert_allclose(np.asarray(out), np.asarray(ref), rtol=2e-2, atol=2e-2)

    print("KERNEL_OK")
</pallas_src>

<mosaic_0001>
module attributes {stable_mosaic.version = 11 : i64} {
  func.func @kernel(%arg0: i32, %arg1: memref<1x4x384xbf16, #tpu.memory_space<vmem>>, %arg2: memref<8x48xbf16, #tpu.memory_space<vmem>>, %arg3: memref<1x8x1xf32, #tpu.memory_space<vmem>>, %arg4: memref<1x8x1xf32, #tpu.memory_space<vmem>>, %arg5: memref<2x8x256xf32, #tpu.memory_space<vmem>>, %arg6: memref<48x288xf32, #tpu.memory_space<vmem>>) attributes {dimension_semantics = [#tpu.dimension_semantics<arbitrary>], iteration_bounds = array<i64: 2>, scalar_prefetch = 0 : i64, scratch_operands = 1 : i64, tpu.core_type = #tpu.core_type<tc>, window_params = [{transform_indices = @transform_0, window_bounds = array<i64: 1, 4, 384>}, {pipeline_mode = #tpu.pipeline_mode<synchronous>, transform_indices = @transform_1, window_bounds = array<i64: 8, 48>}, {pipeline_mode = #tpu.pipeline_mode<synchronous>, transform_indices = @transform_2, window_bounds = array<i64: 1, 8, 1>}, {pipeline_mode = #tpu.pipeline_mode<synchronous>, transform_indices = @transform_3, window_bounds = array<i64: 1, 8, 1>}, {pipeline_mode = #tpu.pipeline_mode<synchronous>, transform_indices = @transform_4, window_bounds = array<i64: 2, 8, 256>}]} {
    %c0_i32 = arith.constant 0 : i32
    %0 = arith.cmpi eq, %arg0, %c0_i32 : i32
    %1 = arith.extui %0 : i1 to i32
    %c0_i32_0 = arith.constant 0 : i32
    %2 = arith.cmpi ne, %1, %c0_i32_0 : i32
    scf.if %2 {
      %cst_58 = arith.constant 0.000000e+00 : f32
      %130 = vector.broadcast %cst_58 : f32 to vector<48x288xf32>
      %c0_59 = arith.constant 0 : index
      %c0_60 = arith.constant 0 : index
      %131 = vector.load %arg6[%c0_59, %c0_60] : memref<48x288xf32, #tpu.memory_space<vmem>>, vector<48x288xf32>
      tpu.vector_store %arg6[%c0_59, %c0_60], %130 {strides = array<i32>} : memref<48x288xf32, #tpu.memory_space<vmem>>, vector<48x288xf32>,
    } else {
    }
    %c0 = arith.constant 0 : index
    %c0_1 = arith.constant 0 : index
    %c0_2 = arith.constant 0 : index
    %3 = vector.load %arg1[%c0, %c0_1, %c0_2] : memref<1x4x384xbf16, #tpu.memory_space<vmem>>, vector<1x4x288xbf16>
    %4 = vector.shape_cast %3 : vector<1x4x288xbf16> to vector<4x288xbf16>
    %5 = arith.extf %4 : vector<4x288xbf16> to vector<4x288xf32>
    %c0_3 = arith.constant 0 : index
    %c0_4 = arith.constant 0 : index
    %6 = vector.load %arg6[%c0_3, %c0_4] : memref<48x288xf32, #tpu.memory_space<vmem>>, vector<4x288xf32>
    tpu.vector_store %arg6[%c0_3, %c0_4], %5 {strides = array<i32>} : memref<48x288xf32, #tpu.memory_space<vmem>>, vector<4x288xf32>,
    %c0_5 = arith.constant 0 : index
    %c0_6 = arith.constant 0 : index
    %c1 = arith.constant 1 : index
    %7 = vector.load %arg1[%c0_5, %c0_6, %c1] : memref<1x4x384xbf16, #tpu.memory_space<vmem>>, vector<1x4x288xbf16>
    %8 = vector.shape_cast %7 : vector<1x4x288xbf16> to vector<4x288xbf16>
    %9 = arith.extf %8 : vector<4x288xbf16> to vector<4x288xf32>
    %c4 = arith.constant 4 : index
    %c0_7 = arith.constant 0 : index
    %10 = vector.load %arg6[%c4, %c0_7] : memref<48x288xf32, #tpu.memory_space<vmem>>, vector<4x288xf32>
    tpu.vector_store %arg6[%c4, %c0_7], %9 {strides = array<i32>} : memref<48x288xf32, #tpu.memory_space<vmem>>, vector<4x288xf32>,
    %c0_8 = arith.constant 0 : index
    %c0_9 = arith.constant 0 : index
    %c2 = arith.constant 2 : index
    %11 = vector.load %arg1[%c0_8, %c0_9, %c2] : memref<1x4x384xbf16, #tpu.memory_space<vmem>>, vector<1x4x288xbf16>
    %12 = vector.shape_cast %11 : vector<1x4x288xbf16> to vector<4x288xbf16>
    %13 = arith.extf %12 : vector<4x288xbf16> to vector<4x288xf32>
    %c8 = arith.constant 8 : index
    %c0_10 = arith.constant 0 : index
    %14 = vector.load %arg6[%c8, %c0_10] : memref<48x288xf32, #tpu.memory_space<vmem>>, vector<4x288xf32>
    tpu.vector_store %arg6[%c8, %c0_10], %13 {strides = array<i32>} : memref<48x288xf32, #tpu.memory_space<vmem>>, vector<4x288xf32>,
    %c0_11 = arith.constant 0 : index
    %c0_12 = arith.constant 0 : index
    %c18 = arith.constant 18 : index
    %15 = vector.load %arg1[%c0_11, %c0_12, %c18] : memref<1x4x384xbf16, #tpu.memory_space<vmem>>, vector<1x4x288xbf16>
    %16 = vector.shape_cast %15 : vector<1x4x288xbf16> to vector<4x288xbf16>
    %17 = arith.extf %16 : vector<4x288xbf16> to vector<4x288xf32>
    %c12 = arith.constant 12 : index
    %c0_13 = arith.constant 0 : index
    %18 = vector.load %arg6[%c12, %c0_13] : memref<48x288xf32, #tpu.memory_space<vmem>>, vector<4x288xf32>
    tpu.vector_store %arg6[%c12, %c0_13], %17 {strides = array<i32>} : memref<48x288xf32, #tpu.memory_space<vmem>>, vector<4x288xf32>,
    %c0_14 = arith.constant 0 : index
    %c0_15 = arith.constant 0 : index
    %c19 = arith.constant 19 : index
    %19 = vector.load %arg1[%c0_14, %c0_15, %c19] : memref<1x4x384xbf16, #tpu.memory_space<vmem>>, vector<1x4x288xbf16>
    %20 = vector.shape_cast %19 : vector<1x4x288xbf16> to vector<4x288xbf16>
    %21 = arith.extf %20 : vector<4x288xbf16> to vector<4x288xf32>
    %c16 = arith.constant 16 : index
    %c0_16 = arith.constant 0 : index
    %22 = vector.load %arg6[%c16, %c0_16] : memref<48x288xf32, #tpu.memory_space<vmem>>, vector<4x288xf32>
    tpu.vector_store %arg6[%c16, %c0_16], %21 {strides = array<i32>} : memref<48x288xf32, #tpu.memory_space<vmem>>, vector<4x288xf32>,
    %c0_17 = arith.constant 0 : index
    %c0_18 = arith.constant 0 : index
    %c20 = arith.constant 20 : index
    %23 = vector.load %arg1[%c0_17, %c0_18, %c20] : memref<1x4x384xbf16, #tpu.memory_space<vmem>>, vector<1x4x288xbf16>
    %24 = vector.shape_cast %23 : vector<1x4x288xbf16> to vector<4x288xbf16>
    %25 = arith.extf %24 : vector<4x288xbf16> to vector<4x288xf32>
    %c20_19 = arith.constant 20 : index
    %c0_20 = arith.constant 0 : index
    %26 = vector.load %arg6[%c20_19, %c0_20] : memref<48x288xf32, #tpu.memory_space<vmem>>, vector<4x288xf32>
    tpu.vector_store %arg6[%c20_19, %c0_20], %25 {strides = array<i32>} : memref<48x288xf32, #tpu.memory_space<vmem>>, vector<4x288xf32>,
    %c0_21 = arith.constant 0 : index
    %c0_22 = arith.constant 0 : index
    %c36 = arith.constant 36 : index
    %27 = vector.load %arg1[%c0_21, %c0_22, %c36] : memref<1x4x384xbf16, #tpu.memory_space<vmem>>, vector<1x4x288xbf16>
    %28 = vector.shape_cast %27 : vector<1x4x288xbf16> to vector<4x288xbf16>
    %29 = arith.extf %28 : vector<4x288xbf16> to vector<4x288xf32>
    %c24 = arith.constant 24 : index
    %c0_23 = arith.constant 0 : index
    %30 = vector.load %arg6[%c24, %c0_23] : memref<48x288xf32, #tpu.memory_space<vmem>>, vector<4x288xf32>
    tpu.vector_store %arg6[%c24, %c0_23], %29 {strides = array<i32>} : memref<48x288xf32, #tpu.memory_space<vmem>>, vector<4x288xf32>,
    %c0_24 = arith.constant 0 : index
    %c0_25 = arith.constant 0 : index
    %c37 = arith.constant 37 : index
    %31 = vector.load %arg1[%c0_24, %c0_25, %c37] : memref<1x4x384xbf16, #tpu.memory_space<vmem>>, vector<1x4x288xbf16>
    %32 = vector.shape_cast %31 : vector<1x4x288xbf16> to vector<4x288xbf16>
    %33 = arith.extf %32 : vector<4x288xbf16> to vector<4x288xf32>
    %c28 = arith.constant 28 : index
    %c0_26 = arith.constant 0 : index
    %34 = vector.load %arg6[%c28, %c0_26] : memref<48x288xf32, #tpu.memory_space<vmem>>, vector<4x288xf32>
    tpu.vector_store %arg6[%c28, %c0_26], %33 {strides = array<i32>} : memref<48x288xf32, #tpu.memory_space<vmem>>, vector<4x288xf32>,
    %c0_27 = arith.constant 0 : index
    %c0_28 = arith.constant 0 : index
    %c38 = arith.constant 38 : index
    %35 = vector.load %arg1[%c0_27, %c0_28, %c38] : memref<1x4x384xbf16, #tpu.memory_space<vmem>>, vector<1x4x288xbf16>
    %36 = vector.shape_cast %35 : vector<1x4x288xbf16> to vector<4x288xbf16>
    %37 = arith.extf %36 : vector<4x288xbf16> to vector<4x288xf32>
    %c32 = arith.constant 32 : index
    %c0_29 = arith.constant 0 : index
    %38 = vector.load %arg6[%c32, %c0_29] : memref<48x288xf32, #tpu.memory_space<vmem>>, vector<4x288xf32>
    tpu.vector_store %arg6[%c32, %c0_29], %37 {strides = array<i32>} : memref<48x288xf32, #tpu.memory_space<vmem>>, vector<4x288xf32>,
    %cst = arith.constant 1.000000e+00 : f32
    %39 = vector.broadcast %cst : f32 to vector<1x288xf32>
    %c36_30 = arith.constant 36 : index
    %c0_31 = arith.constant 0 : index
    %40 = vector.load %arg6[%c36_30, %c0_31] : memref<48x288xf32, #tpu.memory_space<vmem>>, vector<1x288xf32>
    tpu.vector_store %arg6[%c36_30, %c0_31], %39 {strides = array<i32>} : memref<48x288xf32, #tpu.memory_space<vmem>>, vector<1x288xf32>,
    %c0_32 = arith.constant 0 : index
    %c0_33 = arith.constant 0 : index
    %41 = vector.load %arg2[%c0_32, %c0_33] : memref<8x48xbf16, #tpu.memory_space<vmem>>, vector<8x48xbf16>
    %c0_34 = arith.constant 0 : index
    %c0_35 = arith.constant 0 : index
    %42 = vector.load %arg6[%c0_34, %c0_35] : memref<48x288xf32, #tpu.memory_space<vmem>>, vector<48x288xf32>
    %43 = arith.truncf %42 : vector<48x288xf32> to vector<48x288xbf16>
    %cst_36 = arith.constant dense<0.000000e+00> : vector<8x288xf32>
    %44 = tpu.matmul %41, %43, %cst_36 {dimension_numbers = #tpu.dot_dimension_numbers<[1], [0], [0], [1], [0, 0, 1, 1], [], []>} : vector<8x48xbf16>, vector<48x288xbf16>, vector<8x288xf32> -> vector<8x288xf32>
    %cst_37 = arith.constant 0.000000e+00 : f32
    %45 = vector.broadcast %cst_37 : f32 to vector<8x288xf32>
    %46 = arith.maximumf %44, %45 : vector<8x288xf32>
    %47 = vector.extract_strided_slice %46 {offsets = [0, 0], sizes = [8, 16], strides = [1, 1]} : vector<8x288xf32> to vector<8x16xf32>
    %48 = arith.index_cast %arg0 : i32 to index
    %c0_38 = arith.constant 0 : index
    %c0_39 = arith.constant 0 : index
    %49 = vector.load %arg5[%48, %c0_38, %c0_39] : memref<2x8x256xf32, #tpu.memory_space<vmem>>, vector<1x8x16xf32>
    %50 = vector.shape_cast %49 : vector<1x8x16xf32> to vector<8x16xf32>
    %51 = vector.shape_cast %47 : vector<8x16xf32> to vector<1x8x16xf32>
    tpu.vector_store %arg5[%48, %c0_38, %c0_39], %51 {strides = array<i32>} : memref<2x8x256xf32, #tpu.memory_space<vmem>>, vector<1x8x16xf32>,
    %52 = vector.extract_strided_slice %46 {offsets = [0, 18], sizes = [8, 16], strides = [1, 1]} : vector<8x288xf32> to vector<8x16xf32>
    %53 = arith.index_cast %arg0 : i32 to index
    %c0_40 = arith.constant 0 : index
    %c16_41 = arith.constant 16 : index
    %54 = vector.load %arg5[%53, %c0_40, %c16_41] : memref<2x8x256xf32, #tpu.memory_space<vmem>>, vector<1x8x16xf32>
    %55 = vector.shape_cast %54 : vector<1x8x16xf32> to vector<8x16xf32>
    %56 = vector.shape_cast %52 : vector<8x16xf32> to vector<1x8x16xf32>
    tpu.vector_store %arg5[%53, %c0_40, %c16_41], %56 {strides = array<i32>} : memref<2x8x256xf32, #tpu.memory_space<vmem>>, vector<1x8x16xf32>,
    %57 = vector.extract_strided_slice %46 {offsets = [0, 36], sizes = [8, 16], strides = [1, 1]} : vector<8x288xf32> to vector<8x16xf32>
    %58 = arith.index_cast %arg0 : i32 to index
    %c0_42 = arith.constant 0 : index
    %c32_43 = arith.constant 32 : index
    %59 = vector.load %arg5[%58, %c0_42, %c32_43] : memref<2x8x256xf32, #tpu.memory_space<vmem>>, vector<1x8x16xf32>
    %60 = vector.shape_cast %59 : vector<1x8x16xf32> to vector<8x16xf32>
    %61 = vector.shape_cast %57 : vector<8x16xf32> to vector<1x8x16xf32>
    tpu.vector_store %arg5[%58, %c0_42, %c32_43], %61 {strides = array<i32>} : memref<2x8x256xf32, #tpu.memory_space<vmem>>, vector<1x8x16xf32>,
    %62 = vector.extract_strided_slice %46 {offsets = [0, 54], sizes = [8, 16], strides = [1, 1]} : vector<8x288xf32> to vector<8x16xf32>
    %63 = arith.index_cast %arg0 : i32 to index
    %c0_44 = arith.constant 0 : index
    %c48 = arith.constant 48 : index
    %64 = vector.load %arg5[%63, %c0_44, %c48] : memref<2x8x256xf32, #tpu.memory_space<vmem>>, vector<1x8x16xf32>
    %65 = vector.shape_cast %64 : vector<1x8x16xf32> to vector<8x16xf32>
    %66 = vector.shape_cast %62 : vector<8x16xf32> to vector<1x8x16xf32>
    tpu.vector_store %arg5[%63, %c0_44, %c48], %66 {strides = array<i32>} : memref<2x8x256xf32, #tpu.memory_space<vmem>>, vector<1x8x16xf32>,
    %67 = vector.extract_strided_slice %46 {offsets = [0, 72], sizes = [8, 16], strides = [1, 1]} : vector<8x288xf32> to vector<8x16xf32>
    %68 = arith.index_cast %arg0 : i32 to index
    %c0_45 = arith.constant 0 : index
    %c64 = arith.constant 64 : index
    %69 = vector.load %arg5[%68, %c0_45, %c64] : memref<2x8x256xf32, #tpu.memory_space<vmem>>, vector<1x8x16xf32>
    %70 = vector.shape_cast %69 : vector<1x8x16xf32> to vector<8x16xf32>
    %71 = vector.shape_cast %67 : vector<8x16xf32> to vector<1x8x16xf32>
    tpu.vector_store %arg5[%68, %c0_45, %c64], %71 {strides = array<i32>} : memref<2x8x256xf32, #tpu.memory_space<vmem>>, vector<1x8x16xf32>,
    %72 = vector.extract_strided_slice %46 {offsets = [0, 90], sizes = [8, 16], strides = [1, 1]} : vector<8x288xf32> to vector<8x16xf32>
    %73 = arith.index_cast %arg0 : i32 to index
    %c0_46 = arith.constant 0 : index
    %c80 = arith.constant 80 : index
    %74 = vector.load %arg5[%73, %c0_46, %c80] : memref<2x8x256xf32, #tpu.memory_space<vmem>>, vector<1x8x16xf32>
    %75 = vector.shape_cast %74 : vector<1x8x16xf32> to vector<8x16xf32>
    %76 = vector.shape_cast %72 : vector<8x16xf32> to vector<1x8x16xf32>
    tpu.vector_store %arg5[%73, %c0_46, %c80], %76 {strides = array<i32>} : memref<2x8x256xf32, #tpu.memory_space<vmem>>, vector<1x8x16xf32>,
    %77 = vector.extract_strided_slice %46 {offsets = [0, 108], sizes = [8, 16], strides = [1, 1]} : vector<8x288xf32> to vector<8x16xf32>
    %78 = arith.index_cast %arg0 : i32 to index
    %c0_47 = arith.constant 0 : index
    %c96 = arith.constant 96 : index
    %79 = vector.load %arg5[%78, %c0_47, %c96] : memref<2x8x256xf32, #tpu.memory_space<vmem>>, vector<1x8x16xf32>
    %80 = vector.shape_cast %79 : vector<1x8x16xf32> to vector<8x16xf32>
    %81 = vector.shape_cast %77 : vector<8x16xf32> to vector<1x8x16xf32>
    tpu.vector_store %arg5[%78, %c0_47, %c96], %81 {strides = array<i32>} : memref<2x8x256xf32, #tpu.memory_space<vmem>>, vector<1x8x16xf32>,
    %82 = vector.extract_strided_slice %46 {offsets = [0, 126], sizes = [8, 16], strides = [1, 1]} : vector<8x288xf32> to vector<8x16xf32>
    %83 = arith.index_cast %arg0 : i32 to index
    %c0_48 = arith.constant 0 : index
    %c112 = arith.constant 112 : index
    %84 = vector.load %arg5[%83, %c0_48, %c112] : memref<2x8x256xf32, #tpu.memory_space<vmem>>, vector<1x8x16xf32>
    %85 = vector.shape_cast %84 : vector<1x8x16xf32> to vector<8x16xf32>
    %86 = vector.shape_cast %82 : vector<8x16xf32> to vector<1x8x16xf32>
    tpu.vector_store %arg5[%83, %c0_48, %c112], %86 {strides = array<i32>} : memref<2x8x256xf32, #tpu.memory_space<vmem>>, vector<1x8x16xf32>,
    %87 = vector.extract_strided_slice %46 {offsets = [0, 144], sizes = [8, 16], strides = [1, 1]} : vector<8x288xf32> to vector<8x16xf32>
    %88 = arith.index_cast %arg0 : i32 to index
    %c0_49 = arith.constant 0 : index
    %c128 = arith.constant 128 : index
    %89 = vector.load %arg5[%88, %c0_49, %c128] : memref<2x8x256xf32, #tpu.memory_space<vmem>>, vector<1x8x16xf32>
    %90 = vector.shape_cast %89 : vector<1x8x16xf32> to vector<8x16xf32>
    %91 = vector.shape_cast %87 : vector<8x16xf32> to vector<1x8x16xf32>
    tpu.vector_store %arg5[%88, %c0_49, %c128], %91 {strides = array<i32>} : memref<2x8x256xf32, #tpu.memory_space<vmem>>, vector<1x8x16xf32>,
    %92 = vector.extract_strided_slice %46 {offsets = [0, 162], sizes = [8, 16], strides = [1, 1]} : vector<8x288xf32> to vector<8x16xf32>
    %93 = arith.index_cast %arg0 : i32 to index
    %c0_50 = arith.constant 0 : index
    %c144 = arith.constant 144 : index
    %94 = vector.load %arg5[%93, %c0_50, %c144] : memref<2x8x256xf32, #tpu.memory_space<vmem>>, vector<1x8x16xf32>
    %95 = vector.shape_cast %94 : vector<1x8x16xf32> to vector<8x16xf32>
    %96 = vector.shape_cast %92 : vector<8x16xf32> to vector<1x8x16xf32>
    tpu.vector_store %arg5[%93, %c0_50, %c144], %96 {strides = array<i32>} : memref<2x8x256xf32, #tpu.memory_space<vmem>>, vector<1x8x16xf32>,
    %97 = vector.extract_strided_slice %46 {offsets = [0, 180], sizes = [8, 16], strides = [1, 1]} : vector<8x288xf32> to vector<8x16xf32>
    %98 = arith.index_cast %arg0 : i32 to index
    %c0_51 = arith.constant 0 : index
    %c160 = arith.constant 160 : index
    %99 = vector.load %arg5[%98, %c0_51, %c160] : memref<2x8x256xf32, #tpu.memory_space<vmem>>, vector<1x8x16xf32>
    %100 = vector.shape_cast %99 : vector<1x8x16xf32> to vector<8x16xf32>
    %101 = vector.shape_cast %97 : vector<8x16xf32> to vector<1x8x16xf32>
    tpu.vector_store %arg5[%98, %c0_51, %c160], %101 {strides = array<i32>} : memref<2x8x256xf32, #tpu.memory_space<vmem>>, vector<1x8x16xf32>,
    %102 = vector.extract_strided_slice %46 {offsets = [0, 198], sizes = [8, 16], strides = [1, 1]} : vector<8x288xf32> to vector<8x16xf32>
    %103 = arith.index_cast %arg0 : i32 to index
    %c0_52 = arith.constant 0 : index
    %c176 = arith.constant 176 : index
    %104 = vector.load %arg5[%103, %c0_52, %c176] : memref<2x8x256xf32, #tpu.memory_space<vmem>>, vector<1x8x16xf32>
    %105 = vector.shape_cast %104 : vector<1x8x16xf32> to vector<8x16xf32>
    %106 = vector.shape_cast %102 : vector<8x16xf32> to vector<1x8x16xf32>
    tpu.vector_store %arg5[%103, %c0_52, %c176], %106 {strides = array<i32>} : memref<2x8x256xf32, #tpu.memory_space<vmem>>, vector<1x8x16xf32>,
    %107 = vector.extract_strided_slice %46 {offsets = [0, 216], sizes = [8, 16], strides = [1, 1]} : vector<8x288xf32> to vector<8x16xf32>
    %108 = arith.index_cast %arg0 : i32 to index
    %c0_53 = arith.constant 0 : index
    %c192 = arith.constant 192 : index
    %109 = vector.load %arg5[%108, %c0_53, %c192] : memref<2x8x256xf32, #tpu.memory_space<vmem>>, vector<1x8x16xf32>
    %110 = vector.shape_cast %109 : vector<1x8x16xf32> to vector<8x16xf32>
    %111 = vector.shape_cast %107 : vector<8x16xf32> to vector<1x8x16xf32>
    tpu.vector_store %arg5[%108, %c0_53, %c192], %111 {strides = array<i32>} : memref<2x8x256xf32, #tpu.memory_space<vmem>>, vector<1x8x16xf32>,
    %112 = vector.extract_strided_slice %46 {offsets = [0, 234], sizes = [8, 16], strides = [1, 1]} : vector<8x288xf32> to vector<8x16xf32>
    %113 = arith.index_cast %arg0 : i32 to index
    %c0_54 = arith.constant 0 : index
    %c208 = arith.constant 208 : index
    %114 = vector.load %arg5[%113, %c0_54, %c208] : memref<2x8x256xf32, #tpu.memory_space<vmem>>, vector<1x8x16xf32>
    %115 = vector.shape_cast %114 : vector<1x8x16xf32> to vector<8x16xf32>
    %116 = vector.shape_cast %112 : vector<8x16xf32> to vector<1x8x16xf32>
    tpu.vector_store %arg5[%113, %c0_54, %c208], %116 {strides = array<i32>} : memref<2x8x256xf32, #tpu.memory_space<vmem>>, vector<1x8x16xf32>,
    %117 = vector.extract_strided_slice %46 {offsets = [0, 252], sizes = [8, 16], strides = [1, 1]} : vector<8x288xf32> to vector<8x16xf32>
    %118 = arith.index_cast %arg0 : i32 to index
    %c0_55 = arith.constant 0 : index
    %c224 = arith.constant 224 : index
    %119 = vector.load %arg5[%118, %c0_55, %c224] : memref<2x8x256xf32, #tpu.memory_space<vmem>>, vector<1x8x16xf32>
    %120 = vector.shape_cast %119 : vector<1x8x16xf32> to vector<8x16xf32>
    %121 = vector.shape_cast %117 : vector<8x16xf32> to vector<1x8x16xf32>
    tpu.vector_store %arg5[%118, %c0_55, %c224], %121 {strides = array<i32>} : memref<2x8x256xf32, #tpu.memory_space<vmem>>, vector<1x8x16xf32>,
    %122 = vector.extract_strided_slice %46 {offsets = [0, 270], sizes = [8, 16], strides = [1, 1]} : vector<8x288xf32> to vector<8x16xf32>
    %123 = arith.index_cast %arg0 : i32 to index
    %c0_56 = arith.constant 0 : index
    %c240 = arith.constant 240 : index
    %124 = vector.load %arg5[%123, %c0_56, %c240] : memref<2x8x256xf32, #tpu.memory_space<vmem>>, vector<1x8x16xf32>
    %125 = vector.shape_cast %124 : vector<1x8x16xf32> to vector<8x16xf32>
    %126 = vector.shape_cast %122 : vector<8x16xf32> to vector<1x8x16xf32>
    tpu.vector_store %arg5[%123, %c0_56, %c240], %126 {strides = array<i32>} : memref<2x8x256xf32, #tpu.memory_space<vmem>>, vector<1x8x16xf32>,
    %c1_i32 = arith.constant 1 : i32
    %127 = arith.cmpi eq, %arg0, %c1_i32 : i32
    %128 = arith.extui %127 : i1 to i32
    %c0_i32_57 = arith.constant 0 : i32
    %129 = arith.cmpi ne, %128, %c0_i32_57 : i32
    scf.if %129 {
      %c0_58 = arith.constant 0 : index
      %c0_59 = arith.constant 0 : index
      %c0_60 = arith.constant 0 : index
      %130 = vector.load %arg5[%c0_58, %c0_59, %c0_60] : memref<2x8x256xf32, #tpu.memory_space<vmem>>, vector<2x8x256xf32>
      %cst_61 = arith.constant dense<0.000000e+00> : vector<2x8xf32>
      %131 = vector.multi_reduction <add>, %130, %cst_61 [2] : vector<2x8x256xf32> to vector<2x8xf32>
      %132 = vector.shape_cast %131 : vector<2x8xf32> to vector<2x8x1xf32>
      %cst_62 = arith.constant dense<0.000000e+00> : vector<8x1xf32>
      %133 = vector.multi_reduction <add>, %132, %cst_62 [0] : vector<2x8x1xf32> to vector<8x1xf32>
      %134 = vector.shape_cast %133 : vector<8x1xf32> to vector<1x8x1xf32>
      %cst_63 = arith.constant 5.120000e+02 : f32
      %135 = vector.broadcast %cst_63 : f32 to vector<1x8x1xf32>
      %136 = arith.divf %134, %135 : vector<1x8x1xf32>
      %137 = vector.broadcast %136 : vector<1x8x1xf32> to vector<2x8x256xf32>
      %138 = arith.subf %130, %137 : vector<2x8x256xf32>
      %139 = arith.mulf %138, %138 : vector<2x8x256xf32>
      %cst_64 = arith.constant dense<0.000000e+00> : vector<2x8xf32>
      %140 = vector.multi_reduction <add>, %139, %cst_64 [2] : vector<2x8x256xf32> to vector<2x8xf32>
      %141 = vector.shape_cast %140 : vector<2x8xf32> to vector<2x8x1xf32>
      %cst_65 = arith.constant dense<0.000000e+00> : vector<8x1xf32>
      %142 = vector.multi_reduction <add>, %141, %cst_65 [0] : vector<2x8x1xf32> to vector<8x1xf32>
      %143 = vector.shape_cast %142 : vector<8x1xf32> to vector<1x8x1xf32>
      %cst_66 = arith.constant 5.120000e+02 : f32
      %144 = vector.broadcast %cst_66 : f32 to vector<1x8x1xf32>
      %145 = arith.divf %143, %144 : vector<1x8x1xf32>
      %cst_67 = arith.constant 9.99999974E-6 : f32
      %146 = vector.broadcast %cst_67 : f32 to vector<1x8x1xf32>
      %147 = arith.addf %145, %146 : vector<1x8x1xf32>
      %148 = math.rsqrt %147 : vector<1x8x1xf32>
      %c0_68 = arith.constant 0 : index
      %c0_69 = arith.constant 0 : index
      %c0_70 = arith.constant 0 : index
      %149 = vector.load %arg3[%c0_68, %c0_69, %c0_70] : memref<1x8x1xf32, #tpu.memory_space<vmem>>, vector<1x8x1xf32>
      %150 = arith.mulf %149, %148 : vector<1x8x1xf32>
      %c0_71 = arith.constant 0 : index
      %c0_72 = arith.constant 0 : index
      %c0_73 = arith.constant 0 : index
      %151 = vector.load %arg4[%c0_71, %c0_72, %c0_73] : memref<1x8x1xf32, #tpu.memory_space<vmem>>, vector<1x8x1xf32>
      %152 = arith.mulf %136, %150 : vector<1x8x1xf32>
      %153 = arith.subf %151, %152 : vector<1x8x1xf32>
      %154 = vector.broadcast %150 : vector<1x8x1xf32> to vector<2x8x256xf32>
      %155 = arith.mulf %130, %154 : vector<2x8x256xf32>
      %156 = vector.broadcast %153 : vector<1x8x1xf32> to vector<2x8x256xf32>
      %157 = arith.addf %155, %156 : vector<2x8x256xf32>
      %c0_74 = arith.constant 0 : index
      %c0_75 = arith.constant 0 : index
      %c0_76 = arith.constant 0 : index
      %158 = vector.load %arg5[%c0_74, %c0_75, %c0_76] : memref<2x8x256xf32, #tpu.memory_space<vmem>>, vector<2x8x256xf32>
      tpu.vector_store %arg5[%c0_74, %c0_75, %c0_76], %157 {strides = array<i32>} : memref<2x8x256xf32, #tpu.memory_space<vmem>>, vector<2x8x256xf32>,
    } else {
    }
    return
  }
  func.func @transform_0(%arg0: i32) -> (i32, i32, i32) {
    %c0_i32 = arith.constant 0 : i32
    %c0_i32_0 = arith.constant 0 : i32
    %c0_i32_1 = arith.constant 0 : i32
    return %arg0, %c0_i32, %c0_i32_0 : i32, i32, i32
  }
  func.func @transform_1(%arg0: i32) -> (i32, i32) {
    %c0_i32 = arith.constant 0 : i32
    %c0_i32_0 = arith.constant 0 : i32
    %c0_i32_1 = arith.constant 0 : i32
    return %c0_i32, %c0_i32_0 : i32, i32
  }
  func.func @transform_2(%arg0: i32) -> (i32, i32, i32) {
    %c0_i32 = arith.constant 0 : i32
    %c0_i32_0 = arith.constant 0 : i32
    %c0_i32_1 = arith.constant 0 : i32
    %c0_i32_2 = arith.constant 0 : i32
    return %c0_i32, %c0_i32_0, %c0_i32_1 : i32, i32, i32
  }
  func.func @transform_3(%arg0: i32) -> (i32, i32, i32) {
    %c0_i32 = arith.constant 0 : i32
    %c0_i32_0 = arith.constant 0 : i32
    %c0_i32_1 = arith.constant 0 : i32
    %c0_i32_2 = arith.constant 0 : i32
    return %c0_i32, %c0_i32_0, %c0_i32_1 : i32, i32, i32
  }
  func.func @transform_4(%arg0: i32) -> (i32, i32, i32) {
    %c0_i32 = arith.constant 0 : i32
    %c0_i32_0 = arith.constant 0 : i32
    %c0_i32_1 = arith.constant 0 : i32
    %c0_i32_2 = arith.constant 0 : i32
    return %c0_i32, %c0_i32_0, %c0_i32_1 : i32, i32, i32
  }
}

</mosaic_0001>

<llo_original>
// kernel: tpu_custom_call.1
$region0: #{tpu_custom_call.1}
  #allocation0 [shape = 'u32[]', space=smem, size = 0x4, offset = 0x4, fixed_abs, tag = 'smem constant byte address 0x4 - core index']
  #allocation1 [shape = 'u32[144,128]{1,0:T(1,128)}', space=vmem, size = 0x12000, scoped, tag = 'internal scratch']
  #allocation2 [shape = 'f32[48,288]{1,0:T(8,128)}', space=vmem, size = 0x12000, scoped, tag = 'scratch operand']
  %s0 = inlined_call_operand.vmem [shape: bf16[2,4,384], index: 0, kind: input, shape index: {}]
  %s1 = inlined_call_operand.vmem [shape: bf16[8,48], index: 1, kind: input, shape index: {}]
  %s2 = inlined_call_operand.vmem [shape: f32[1,8,1], index: 2, kind: input, shape index: {}]
  %s3 = inlined_call_operand.vmem [shape: f32[1,8,1], index: 3, kind: input, shape index: {}]
  %s4 = inlined_call_operand.hbm [shape: f32[2,8,256], index: 4, kind: output, shape index: {}]
  %s5 = sld [smem:[#allocation0]]
  $region57: #{tpu_custom_call.1} parent=0
    _
  %s7 = ssub.s32 1, %s5
  %s8 = scalar_select 0, %s7, %s5
  $region1: #{tpu_custom_call.1} parent=0
    #allocation3 [shape = 'u8[16384]{0}', space=vmem, size = 0x4000, scoped, tag = 'output window, operand 0, single buffered']
    #allocation4 [shape = 's32[2]{0}', space=sflag, size = 0x8, scoped, tag = 'scoped memory for tpu_custom_call.1']
    %9 = vsyncpa [#allocation4], 0
    loop: start=0, step=1, limit=4
    $region2: #{tpu_custom_call.1} parent=1 // loop_pre_header
      _
    $region3: #{tpu_custom_call.1} parent=1 // loop_header
      %s11 = sphi 0, %s15
      %p12 = scmp.ge.s32.totalorder %s11, 4
      %s21 = sphi 0, %s23
      %s24 = sphi 0, %s21
      %s25 = sphi 0, %s24
      %s41 = sphi 0, %s25
      %s45 = sphi 0, %s45
      %s47 = sphi 0, %s45
      %s48 = sphi 0, %s47
      %s62 = sphi 0, %s48
      %s66 = sphi 0, %s66
      %s68 = sphi 0, %s66
      %s69 = sphi 0, %s68
      %s83 = sphi 0, %s69
      %s87 = sphi 0, %s87
      %s89 = sphi 0, %s87
      %s90 = sphi 0, %s89
      %s104 = sphi 0, %s90
      %s108 = sphi 0, %s108
      %s110 = sphi 0, %s108
      %s111 = sphi 0, %s110
      %s125 = sphi 0, %s111
    $region4: #{tpu_custom_call.1} parent=1 // loop_header_branch
      %14 = sbr.rel (%p12) target = $region8
    $region5: #{tpu_custom_call.1} parent=1 // loop_body
      %s16 = ssub.s32 %s11, 1
      %s17 = ssub.s32 %s11, 2
      %s18 = sadd.s32 %s11, 1
      %s19 = ssub.s32 %s11, %s18
      %p20 = scmp.eq.s32.totalorder %s19, 0
      %s22 = sadd.s32 %s21, 1
      %s23 = scalar_select %p20, %s21, %s22
      %p26 = pneg %p20
      %p27 = scmp.eq.s32.totalorder %s11, 1
      %p28 = por %p26, %p27
      %p29 = scmp.ne.s32.totalorder %s21, %s24
      %p30 = scmp.eq.s32.totalorder %s11, 0
      %p31 = por %p29, %p30
      %p32 = scmp.ne.s32.totalorder %s21, %s24
      %p33 = scmp.eq.s32.totalorder %s16, 1
      %p34 = por %p32, %p33
      %p35 = scmp.ne.s32.totalorder %s24, %s25
      %p36 = scmp.eq.s32.totalorder %s16, 0
      %p37 = por %p35, %p36
      %p38 = scmp.ne.s32.totalorder %s24, %s25
      %p39 = scmp.eq.s32.totalorder %s17, 1
      %p40 = por %p38, %p39
      %p42 = scmp.ne.s32.totalorder %s25, %s41
      %p43 = scmp.eq.s32.totalorder %s17, 0
      %p44 = por %p42, %p43
      %s46 = sadd.s32 %s45, 1
      %p49 = scmp.eq.s32.totalorder %s11, 1
      %p50 = scmp.ne.s32.totalorder %s45, %s47
      %p51 = scmp.eq.s32.totalorder %s11, 0
      %p52 = por %p50, %p51
      %p53 = scmp.ne.s32.totalorder %s45, %s47
      %p54 = scmp.eq.s32.totalorder %s16, 1
      %p55 = por %p53, %p54
      %p56 = scmp.ne.s32.totalorder %s47, %s48
      %p57 = scmp.eq.s32.totalorder %s16, 0
      %p58 = por %p56, %p57
      %p59 = scmp.ne.s32.totalorder %s47, %s48
      %p60 = scmp.eq.s32.totalorder %s17, 1
      %p61 = por %p59, %p60
      %p63 = scmp.ne.s32.totalorder %s48, %s62
      %p64 = scmp.eq.s32.totalorder %s17, 0
      %p65 = por %p63, %p64
      %s67 = sadd.s32 %s66, 1
      %p70 = scmp.eq.s32.totalorder %s11, 1
      %p71 = scmp.ne.s32.totalorder %s66, %s68
      %p72 = scmp.eq.s32.totalorder %s11, 0
      %p73 = por %p71, %p72
      %p74 = scmp.ne.s32.totalorder %s66, %s68
      %p75 = scmp.eq.s32.totalorder %s16, 1
      %p76 = por %p74, %p75
      %p77 = scmp.ne.s32.totalorder %s68, %s69
      %p78 = scmp.eq.s32.totalorder %s16, 0
      %p79 = por %p77, %p78
      %p80 = scmp.ne.s32.totalorder %s68, %s69
      %p81 = scmp.eq.s32.totalorder %s17, 1
      %p82 = por %p80, %p81
      %p84 = scmp.ne.s32.totalorder %s69, %s83
      %p85 = scmp.eq.s32.totalorder %s17, 0
      %p86 = por %p84, %p85
      %s88 = sadd.s32 %s87, 1
      %p91 = scmp.eq.s32.totalorder %s11, 1
      %p92 = scmp.ne.s32.totalorder %s87, %s89
      %p93 = scmp.eq.s32.totalorder %s11, 0
      %p94 = por %p92, %p93
      %p95 = scmp.ne.s32.totalorder %s87, %s89
      %p96 = scmp.eq.s32.totalorder %s16, 1
      %p97 = por %p95, %p96
      %p98 = scmp.ne.s32.totalorder %s89, %s90
      %p99 = scmp.eq.s32.totalorder %s16, 0
      %p100 = por %p98, %p99
      %p101 = scmp.ne.s32.totalorder %s89, %s90
      %p102 = scmp.eq.s32.totalorder %s17, 1
      %p103 = por %p101, %p102
      %p105 = scmp.ne.s32.totalorder %s90, %s104
      %p106 = scmp.eq.s32.totalorder %s17, 0
      %p107 = por %p105, %p106
      %s109 = sadd.s32 %s108, 1
      %p112 = scmp.eq.s32.totalorder %s11, 1
      %p113 = scmp.ne.s32.totalorder %s108, %s110
      %p114 = scmp.eq.s32.totalorder %s11, 0
      %p115 = por %p113, %p114
      %p116 = scmp.ne.s32.totalorder %s108, %s110
      %p117 = scmp.eq.s32.totalorder %s16, 1
      %p118 = por %p116, %p117
      %p119 = scmp.ne.s32.totalorder %s110, %s111
      %p120 = scmp.eq.s32.totalorder %s16, 0
      %p121 = por %p119, %p120
      %p122 = scmp.ne.s32.totalorder %s110, %s111
      %p123 = scmp.eq.s32.totalorder %s17, 1
      %p124 = por %p122, %p123
      %p126 = scmp.ne.s32.totalorder %s111, %s125
      %p127 = scmp.eq.s32.totalorder %s17, 0
      %p128 = por %p126, %p127
      %p129 = scmp.le.s32.totalorder 1, %s11
      %p130 = scmp.lt.s32.totalorder %s11, 3
      %p131 = pnand %p129, %p130
      %p132 = pneg %p131
      // Predicated region
      $region9: #{tpu_custom_call.1} parent=5 // pred_check
        _
      $region10: #{tpu_custom_call.1} parent=5 // pred_check_branch
        %134 = sbr.rel (%p131) target = $region12
      $region11: #{tpu_custom_call.1} parent=5 // pred_region
        %s135 = ssub.s32 %s11, 1
        // Predicated region
        $region13: #{tpu_custom_call.1} parent=11 // pred_check
          %p136 = pneg %p58
        $region14: #{tpu_custom_call.1} parent=11 // pred_check_branch
          %138 = sbr.rel (%p136) target = $region16
        $region15: #{tpu_custom_call.1} parent=11 // pred_region
          _
        $region16: #{tpu_custom_call.1} parent=11 // pred_fallthru
          _
        // Predicated region
        $region17: #{tpu_custom_call.1} parent=11 // pred_check
          %p139 = pneg %p79
        $region18: #{tpu_custom_call.1} parent=11 // pred_check_branch
          %141 = sbr.rel (%p139) target = $region20
        $region19: #{tpu_custom_call.1} parent=11 // pred_region
          _
        $region20: #{tpu_custom_call.1} parent=11 // pred_fallthru
          _
        // Predicated region
        $region21: #{tpu_custom_call.1} parent=11 // pred_check
          %p142 = pneg %p100
        $region22: #{tpu_custom_call.1} parent=11 // pred_check_branch
          %144 = sbr.rel (%p142) target = $region24
        $region23: #{tpu_custom_call.1} parent=11 // pred_region
          _
        $region24: #{tpu_custom_call.1} parent=11 // pred_fallthru
          _
      $region12: #{tpu_custom_call.1} parent=5 // pred_fallthru
        _
      %p145 = scmp.lt.s32.totalorder %s11, 2
      // Predicated region
      $region25: #{tpu_custom_call.1} parent=5 // pred_check
        %p146 = pneg %p145
      $region26: #{tpu_custom_call.1} parent=5 // pred_check_branch
        %148 = sbr.rel (%p146) target = $region28
      $region27: #{tpu_custom_call.1} parent=5 // pred_region
        // Predicated region
        $region29: #{tpu_custom_call.1} parent=27 // pred_check
          %p149 = pneg %p31
        $region30: #{tpu_custom_call.1} parent=27 // pred_check_branch
          %151 = sbr.rel (%p149) target = $region32
        $region31: #{tpu_custom_call.1} parent=27 // pred_region
          %p152 = scmp.lt.s32.totalorder %s11, 1
          %s153 = scalar_select %p152, %s11, 1
          %s154 = smul.addr %s153, 3
          %s155 = smul.addr %s154, 2
          %s156 = scalar_lea.vmem %s0, %s155
        $region32: #{tpu_custom_call.1} parent=27 // pred_fallthru
          _
      $region28: #{tpu_custom_call.1} parent=5 // pred_fallthru
        _
      %p157 = scmp.le.s32.totalorder 1, %s11
      %p158 = scmp.lt.s32.totalorder %s11, 3
      %p159 = pnand %p157, %p158
      %p160 = pneg %p159
      // Predicated region
      $region33: #{tpu_custom_call.1} parent=5 // pred_check
        _
      $region34: #{tpu_custom_call.1} parent=5 // pred_check_branch
        %162 = sbr.rel (%p159) target = $region36
      $region35: #{tpu_custom_call.1} parent=5 // pred_region
        %s163 = ssub.s32 %s11, 1
        %p164 = scmp.lt.s32.totalorder %s16, 1
        %s165 = scalar_select %p164, %s16, 1
        %s166 = smul.addr %s165, 3
        %s167 = smul.addr %s166, 2
        %s168 = scalar_lea.vmem %s0, %s167
        %p169 = pneg %p37
        %p170 = pneg %p34
        %p171 = pneg %p58
        %p172 = pneg %p55
        %p173 = pneg %p79
        %p174 = pneg %p76
        %p175 = pneg %p100
        %p176 = pneg %p97
        %p177 = pneg %p121
        %p178 = pneg %p118
        %p179 = scmp.lt.s32.totalorder %s16, 1
        %s180 = scalar_select %p179, %s16, 1
        %s181 = smul.addr %s180, 3
        %s182 = smul.addr %s181, 2
        %s183 = scalar_lea.vmem %s0, %s182
        %p185 = scmp.eq.s32.totalorder %s16, 0
        // Predicated region
        $region37: #{tpu_custom_call.1} parent=35 // pred_check
          %p186 = pneg %p185
        $region38: #{tpu_custom_call.1} parent=35 // pred_check_branch
          %188 = sbr.rel (%p186) target = $region40
        $region39: #{tpu_custom_call.1} parent=35 // pred_region
          %189 = vst [vmem:[#allocation2] sm:$0xff] 0.0
          %190 = vst [vmem:[#allocation2 + $0x8] sm:$0xff] 0.0
          %vm191 = vcmask 261120
          %192 = vst.msk [vmem:[#allocation2 + $0x10] sm:$0xff] %vm191, 0.0
          %193 = vst [vmem:[#allocation2 + $0x18] sm:$0xff] 0.0
          %194 = vst [vmem:[#allocation2 + $0x20] sm:$0xff] 0.0
          %195 = vst.msk [vmem:[#allocation2 + $0x28] sm:$0xff] %vm191, 0.0
          %196 = vst [vmem:[#allocation2 + $0x30] sm:$0xff] 0.0
          %197 = vst [vmem:[#allocation2 + $0x38] sm:$0xff] 0.0
          %198 = vst.msk [vmem:[#allocation2 + $0x40] sm:$0xff] %vm191, 0.0
          %199 = vst [vmem:[#allocation2 + $0x48] sm:$0xff] 0.0
          %200 = vst [vmem:[#allocation2 + $0x50] sm:$0xff] 0.0
          %201 = vst.msk [vmem:[#allocation2 + $0x58] sm:$0xff] %vm191, 0.0
          %202 = vst [vmem:[#allocation2 + $0x60] sm:$0xff] 0.0
          %203 = vst [vmem:[#allocation2 + $0x68] sm:$0xff] 0.0
          %204 = vst.msk [vmem:[#allocation2 + $0x70] sm:$0xff] %vm191, 0.0
          %205 = vst [vmem:[#allocation2 + $0x78] sm:$0xff] 0.0
          %206 = vst [vmem:[#allocation2 + $0x80] sm:$0xff] 0.0
          %207 = vst.msk [vmem:[#allocation2 + $0x88] sm:$0xff] %vm191, 0.0
        $region40: #{tpu_custom_call.1} parent=35 // pred_fallthru
          _
        %v208 = vld [vmem:[%s183] sm:$0x3f]
        %v209 = vunpack.c.l.bf16 %v208
        %v210 = vunpack.c.h.bf16 %v208
        %v212 = vcombine.high %v209, %v209
        %214 = vst [vmem:[#allocation2] sm:$0xf] %v209
        %215 = vst [vmem:[#allocation2 + $0x8] sm:$0xf] %v212
        %vm216 = vcmask 257024
        %217 = vst.msk [vmem:[#allocation2 + $0x10] sm:$0xf] %vm216, %v210
        %v218 = vld [vmem:[%s183] sm:$0x3f]
        %v219 = vunpack.c.l.bf16 %v218
        %v220 = vunpack.c.h.bf16 %v218
        %v223 = vcombine.low %v219, %v219
        %v224 = vcombine.low %v220, %v220
        %225 = vrot.lane.b32.xlu0 %v223, 127
        %v226 = vpop.permute.xlu0 %225
        %227 = vrot.lane.b32.xlu0 %v219, 127
        %v228 = vpop.permute.xlu0 %227
        %229 = vrot.lane.b32.xlu0 %v224, 127
        %v230 = vpop.permute.xlu0 %229
        %vm231 = vcmask 1039360
        %v232 = vsel %vm231, %v226, %v228
        %v233 = vsel %vm231, %v228, %v230
        %237 = vst [vmem:[#allocation2] sm:$0xf0] %v232
        %238 = vst [vmem:[#allocation2 + $0x8] sm:$0xf0] %v233
        %vm239 = vcmask 261124
        %240 = vst.msk [vmem:[#allocation2 + $0x10] sm:$0xf0] %vm239, %v230
        %v241 = vld [vmem:[%s183] sm:$0x3f]
        %v242 = vunpack.c.l.bf16 %v241
        %v243 = vunpack.c.h.bf16 %v241
        %v246 = vcombine.high %v242, %v242
        %247 = vrot.lane.b32.xlu0 %v242, 126
        %v248 = vpop.permute.xlu0 %247
        %249 = vrot.lane.b32.xlu0 %v246, 126
        %v250 = vpop.permute.xlu0 %249
        %251 = vrot.lane.b32.xlu0 %v243, 126
        %v252 = vpop.permute.xlu0 %251
        %vm253 = vcmask 1031168
        %v254 = vsel %vm253, %v248, %v250
        %v255 = vsel %vm253, %v250, %v252
        %259 = vst [vmem:[#allocation2 + $0x18] sm:$0xf] %v254
        %260 = vst [vmem:[#allocation2 + $0x20] sm:$0xf] %v255
        %261 = vst.msk [vmem:[#allocation2 + $0x28] sm:$0xf] %vm216, %v252
        %v262 = vld [vmem:[%s183] sm:$0x3f]
        %v263 = vunpack.c.l.bf16 %v262
        %v264 = vunpack.c.h.bf16 %v262
        %v267 = vcombine.low %v263, %v263
        %v268 = vcombine.low %v264, %v264
        %269 = vrot.lane.b32.xlu0 %v267, 110
        %v270 = vpop.permute.xlu0 %269
        %271 = vrot.lane.b32.xlu0 %v263, 110
        %v272 = vpop.permute.xlu0 %271
        %273 = vrot.lane.b32.xlu0 %v268, 110
        %v274 = vpop.permute.xlu0 %273
        %vm275 = vcmask 900096
        %v276 = vsel %vm275, %v270, %v272
        %v277 = vsel %vm275, %v272, %v274
        %281 = vst [vmem:[#allocation2 + $0x18] sm:$0xf0] %v276
        %282 = vst [vmem:[#allocation2 + $0x20] sm:$0xf0] %v277
        %283 = vst.msk [vmem:[#allocation2 + $0x28] sm:$0xf0] %vm239, %v274
        %v284 = vld [vmem:[%s183] sm:$0x3f]
        %v285 = vunpack.c.l.bf16 %v284
        %v286 = vunpack.c.h.bf16 %v284
        %v289 = vcombine.high %v285, %v285
        %290 = vrot.lane.b32.xlu0 %v285, 109
        %v291 = vpop.permute.xlu0 %290
        %292 = vrot.lane.b32.xlu0 %v289, 109
        %v293 = vpop.permute.xlu0 %292
        %294 = vrot.lane.b32.xlu0 %v286, 109
        %v295 = vpop.permute.xlu0 %294
        %vm296 = vcmask 891904
        %v297 = vsel %vm296, %v291, %v293
        %v298 = vsel %vm296, %v293, %v295
        %302 = vst [vmem:[#allocation2 + $0x30] sm:$0xf] %v297
        %303 = vst [vmem:[#allocation2 + $0x38] sm:$0xf] %v298
        %304 = vst.msk [vmem:[#allocation2 + $0x40] sm:$0xf] %vm216, %v295
        %v305 = vld [vmem:[%s183] sm:$0x3f]
        %v306 = vunpack.c.l.bf16 %v305
        %v307 = vunpack.c.h.bf16 %v305
        %v310 = vcombine.low %v306, %v306
        %v311 = vcombine.low %v307, %v307
        %312 = vrot.lane.b32.xlu0 %v310, 108
        %v313 = vpop.permute.xlu0 %312
        %314 = vrot.lane.b32.xlu0 %v306, 108
        %v315 = vpop.permute.xlu0 %314
        %316 = vrot.lane.b32.xlu0 %v311, 108
        %v317 = vpop.permute.xlu0 %316
        %vm318 = vcmask 883712
        %v319 = vsel %vm318, %v313, %v315
        %v320 = vsel %vm318, %v315, %v317
        %324 = vst [vmem:[#allocation2 + $0x30] sm:$0xf0] %v319
        %325 = vst [vmem:[#allocation2 + $0x38] sm:$0xf0] %v320
        %326 = vst.msk [vmem:[#allocation2 + $0x40] sm:$0xf0] %vm239, %v317
        %v327 = vld [vmem:[%s183] sm:$0x3f]
        %v328 = vunpack.c.l.bf16 %v327
        %v329 = vunpack.c.h.bf16 %v327
        %v332 = vcombine.high %v328, %v328
        %333 = vrot.lane.b32.xlu0 %v328, 92
        %v334 = vpop.permute.xlu0 %333
        %335 = vrot.lane.b32.xlu0 %v332, 92
        %v336 = vpop.permute.xlu0 %335
        %337 = vrot.lane.b32.xlu0 %v329, 92
        %v338 = vpop.permute.xlu0 %337
        %vm339 = vcmask 752640
        %v340 = vsel %vm339, %v334, %v336
        %v341 = vsel %vm339, %v336, %v338
        %345 = vst [vmem:[#allocation2 + $0x48] sm:$0xf] %v340
        %346 = vst [vmem:[#allocation2 + $0x50] sm:$0xf] %v341
        %347 = vst.msk [vmem:[#allocation2 + $0x58] sm:$0xf] %vm216, %v338
        %v348 = vld [vmem:[%s183] sm:$0x3f]
        %v349 = vunpack.c.l.bf16 %v348
        %v350 = vunpack.c.h.bf16 %v348
        %v353 = vcombine.low %v349, %v349
        %v354 = vcombine.low %v350, %v350
        %355 = vrot.lane.b32.xlu0 %v353, 91
        %v356 = vpop.permute.xlu0 %355
        %357 = vrot.lane.b32.xlu0 %v349, 91
        %v358 = vpop.permute.xlu0 %357
        %359 = vrot.lane.b32.xlu0 %v354, 91
        %v360 = vpop.permute.xlu0 %359
        %vm361 = vcmask 744448
        %v362 = vsel %vm361, %v356, %v358
        %v363 = vsel %vm361, %v358, %v360
        %367 = vst [vmem:[#allocation2 + $0x48] sm:$0xf0] %v362
        %368 = vst [vmem:[#allocation2 + $0x50] sm:$0xf0] %v363
        %369 = vst.msk [vmem:[#allocation2 + $0x58] sm:$0xf0] %vm239, %v360
        %v370 = vld [vmem:[%s183] sm:$0x3f]
        %v371 = vunpack.c.l.bf16 %v370
        %v372 = vunpack.c.h.bf16 %v370
        %v375 = vcombine.high %v371, %v371
        %376 = vrot.lane.b32.xlu0 %v371, 90
        %v377 = vpop.permute.xlu0 %376
        %378 = vrot.lane.b32.xlu0 %v375, 90
        %v379 = vpop.permute.xlu0 %378
        %380 = vrot.lane.b32.xlu0 %v372, 90
        %v381 = vpop.permute.xlu0 %380
        %vm382 = vcmask 736256
        %v383 = vsel %vm382, %v377, %v379
        %v384 = vsel %vm382, %v379, %v381
        %388 = vst [vmem:[#allocation2 + $0x60] sm:$0xf] %v383
        %389 = vst [vmem:[#allocation2 + $0x68] sm:$0xf] %v384
        %390 = vst.msk [vmem:[#allocation2 + $0x70] sm:$0xf] %vm216, %v381
        %v391 = vlaneseq
        %vm392 = vcmp.ge.s32.totalorder %v391, 0
        %vm393 = vcmp.lt.s32.totalorder %v391, 288
        %vm394 = vmand %vm392, %vm393
        %s395 = scalar_lea.vmem [#allocation2], 100
        %396 = vst.msk [vmem:[%s395] ss:$8 sm:$0x7] %vm394, 1.0
        %397 = vst.msk [vmem:[%s395] ss:$8 sm:$0x0] %vm394, 1.0
        %v398 = vld [vmem:[%s1] sm:$0xf]
        %v399 = vld [vmem:[#allocation2] sm:$0xff]
        %v400 = vld [vmem:[#allocation2 + $0x8] sm:$0xff]
        %v401 = vld [vmem:[#allocation2 + $0x10] sm:$0xff]
        %v402 = vld [vmem:[#allocation2 + $0x18] sm:$0xff]
        %v403 = vld [vmem:[#allocation2 + $0x20] sm:$0xff]
        %v404 = vld [vmem:[#allocation2 + $0x28] sm:$0xff]
        %v405 = vld [vmem:[#allocation2 + $0x30] sm:$0xff]
        %v406 = vld [vmem:[#allocation2 + $0x38] sm:$0xff]
        %v407 = vld [vmem:[#allocation2 + $0x40] sm:$0xff]
        %v408 = vld [vmem:[#allocation2 + $0x48] sm:$0xff]
        %v409 = vld [vmem:[#allocation2 + $0x50] sm:$0xff]
        %v410 = vld [vmem:[#allocation2 + $0x58] sm:$0xff]
        %v411 = vld [vmem:[#allocation2 + $0x60] sm:$0xff]
        %v412 = vld [vmem:[#allocation2 + $0x68] sm:$0xff]
        %v413 = vld [vmem:[#allocation2 + $0x70] sm:$0xff]
        %v414 = vld [vmem:[#allocation2 + $0x78] sm:$0xff]
        %v415 = vld [vmem:[#allocation2 + $0x80] sm:$0xff]
        %v416 = vld [vmem:[#allocation2 + $0x88] sm:$0xff]
        %v417 = vpack.c.bf16 %v402, %v399
        %v418 = vpack.c.bf16 %v403, %v400
        %v419 = vpack.c.bf16 %v404, %v401
        %v420 = vpack.c.bf16 %v408, %v405
        %v421 = vpack.c.bf16 %v409, %v406
        %v422 = vpack.c.bf16 %v410, %v407
        %v423 = vpack.c.bf16 %v414, %v411
        %v424 = vpack.c.bf16 %v415, %v412
        %v425 = vpack.c.bf16 %v416, %v413
        %vm426 = vcmask 392192
        %v428 = vsel %vm426, %v398, 0
        %430 = vmatprep.subr.bf16.mxu0 %v418
        %431 = vmatpush1.bf16.msra.mxu0 %v417
        %432 = vmatprep.subr.bf16.mxu0 %v421
        %433 = vmatpush1.bf16.msra.mxu0 %v420
        %434 = vmatprep.subr.bf16.mxu0 %v424
        %435 = vmatpush1.bf16.msra.mxu0 %v423
        %436 = vmatprep.subr.bf16.mxu0 0
        %437 = vmatpush1.bf16.msra.mxu0 0
        %438 = vmatprep.subr.bf16.mxu0 0
        %439 = vmatpush1.bf16.msra.mxu0 0
        %440 = vmatprep.subr.bf16.mxu0 0
        %441 = vmatpush1.bf16.msra.mxu0 0
        %442 = vmatprep.subr.bf16.mxu0 0
        %443 = vmatpush1.bf16.msra.mxu0 0
        %444 = vmatprep.subr.bf16.mxu0 0
        %445 = vmatpush1.bf16.msra.mxu0 0
        %446 = vmatprep.subr.bf16.mxu0 0
        %447 = vmatpush1.bf16.msra.mxu0 0
        %448 = vmatprep.subr.bf16.mxu0 0
        %449 = vmatpush1.bf16.msra.mxu0 0
        %450 = vmatprep.subr.bf16.mxu0 0
        %451 = vmatpush1.bf16.msra.mxu0 0
        %452 = vmatprep.subr.bf16.mxu0 0
        %453 = vmatpush1.bf16.msra.mxu0 0
        %454 = vmatprep.subr.bf16.mxu0 0
        %455 = vmatpush1.bf16.msra.mxu0 0
        %456 = vmatprep.subr.bf16.mxu0 0
        %457 = vmatpush1.bf16.msra.mxu0 0
        %458 = vmatprep.subr.bf16.mxu0 0
        %459 = vmatpush1.bf16.msra.mxu0 0
        %460 = vmatprep.subr.bf16.mxu0 0
        %461 = vmatpush1.bf16.msra.mxu0 0
        %462 = vmatprep.mubr.bf16.mxu0 0
        %463 = vmatmul.mubr.bf16.gmra.mrb[0].mxu0 %v428
        %v464 = vpop.f32.mrb[0].mxu0
        %v465 = vadd.f32 0.0, %v464
        %v466 = vpop.f32.mrb[0].mxu0
        %v467 = vadd.f32 0.0, %v466
        %v468 = vpop.f32.mrb[0].mxu0
        %v469 = vpop.f32.mrb[0].mxu0
        %470 = vdwg.mxu0
        %471 = vmatprep.subr.bf16.mxu0 0
        %472 = vmatpush1.bf16.msra.mxu0 %v419
        %473 = vmatprep.subr.bf16.mxu0 0
        %474 = vmatpush1.bf16.msra.mxu0 %v422
        %475 = vmatprep.subr.bf16.mxu0 0
        %476 = vmatpush1.bf16.msra.mxu0 %v425
        %477 = vmatprep.subr.bf16.mxu0 0
        %478 = vmatpush1.bf16.msra.mxu0 0
        %479 = vmatprep.subr.bf16.mxu0 0
        %480 = vmatpush1.bf16.msra.mxu0 0
        %481 = vmatprep.subr.bf16.mxu0 0
        %482 = vmatpush1.bf16.msra.mxu0 0
        %483 = vmatprep.subr.bf16.mxu0 0
        %484 = vmatpush1.bf16.msra.mxu0 0
        %485 = vmatprep.subr.bf16.mxu0 0
        %486 = vmatpush1.bf16.msra.mxu0 0
        %487 = vmatprep.subr.bf16.mxu0 0
        %488 = vmatpush1.bf16.msra.mxu0 0
        %489 = vmatprep.subr.bf16.mxu0 0
        %490 = vmatpush1.bf16.msra.mxu0 0
        %491 = vmatprep.subr.bf16.mxu0 0
        %492 = vmatpush1.bf16.msra.mxu0 0
        %493 = vmatprep.subr.bf16.mxu0 0
        %494 = vmatpush1.bf16.msra.mxu0 0
        %495 = vmatprep.subr.bf16.mxu0 0
        %496 = vmatpush1.bf16.msra.mxu0 0
        %497 = vmatprep.subr.bf16.mxu0 0
        %498 = vmatpush1.bf16.msra.mxu0 0
        %499 = vmatprep.subr.bf16.mxu0 0
        %500 = vmatpush1.bf16.msra.mxu0 0
        %501 = vmatprep.subr.bf16.mxu0 0
        %502 = vmatpush1.bf16.msra.mxu0 0
        %503 = vmatprep.mubr.bf16.mxu0 0
        %504 = vmatmul.mubr.bf16.gmra.mrb[0].mxu0 %v428
        %v505 = vpop.f32.mrb[0].mxu0
        %v506 = vadd.f32 0.0, %v505
        %v507 = vpop.f32.mrb[0].mxu0
        %v508 = vpop.f32.mrb[0].mxu0
        %v509 = vpop.f32.mrb[0].mxu0
        %510 = vdwg.mxu0
        %v511 = vmax.f32 %v465, 0.0
        %v512 = vmax.f32 %v467, 0.0
        %v513 = vmax.f32 %v506, 0.0
        %s514 = smul.u32 %s16, 2
        %s515 = smul.addr %s514, 8
        %s516 = scalar_lea.vmem [#allocation3], %s515
        %vm517 = vcmask 130048
        %518 = vst.msk [vmem:[%s516] sm:$0xff] %vm517, %v511
        %520 = vrot.lane.b32.xlu0 %v511, 126
        %v521 = vpop.permute.xlu0 %520
        %vm523 = vcmask 261248
        %524 = vst.msk [vmem:[%s516] sm:$0xff] %vm523, %v521
        %525 = vrot.lane.b32.xlu0 %v511, 124
        %v526 = vpop.permute.xlu0 %525
        %vm528 = vcmask 392448
        %529 = vst.msk [vmem:[%s516] sm:$0xff] %vm528, %v526
        %530 = vrot.lane.b32.xlu0 %v511, 122
        %v531 = vpop.permute.xlu0 %530
        %vm533 = vcmask 523648
        %534 = vst.msk [vmem:[%s516] sm:$0xff] %vm533, %v531
        %535 = vrot.lane.b32.xlu0 %v511, 120
        %v536 = vpop.permute.xlu0 %535
        %vm538 = vcmask 654848
        %539 = vst.msk [vmem:[%s516] sm:$0xff] %vm538, %v536
        %540 = vrot.lane.b32.xlu0 %v511, 118
        %v541 = vpop.permute.xlu0 %540
        %vm543 = vcmask 786048
        %544 = vst.msk [vmem:[%s516] sm:$0xff] %vm543, %v541
        %545 = vrot.lane.b32.xlu0 %v511, 116
        %v546 = vpop.permute.xlu0 %545
        %vm548 = vcmask 917248
        %549 = vst.msk [vmem:[%s516] sm:$0xff] %vm548, %v546
        %551 = vrot.lane.b32.xlu0 %v511, 114
        %v552 = vpop.permute.xlu0 %551
        %553 = vrot.lane.b32.xlu0 %v512, 114
        %v554 = vpop.permute.xlu0 %553
        %vm555 = vcmask 932864
        %v556 = vsel %vm555, %v552, %v554
        %vm558 = vcmask 1048448
        %559 = vst.msk [vmem:[%s516] sm:$0xff] %vm558, %v556
        %560 = vrot.lane.b32.xlu0 %v512, 112
        %v561 = vpop.permute.xlu0 %560
        %563 = vst.msk [vmem:[%s516 + $0x8] sm:$0xff] %vm517, %v561
        %564 = vrot.lane.b32.xlu0 %v512, 110
        %v565 = vpop.permute.xlu0 %564
        %567 = vst.msk [vmem:[%s516 + $0x8] sm:$0xff] %vm523, %v565
        %568 = vrot.lane.b32.xlu0 %v512, 108
        %v569 = vpop.permute.xlu0 %568
        %571 = vst.msk [vmem:[%s516 + $0x8] sm:$0xff] %vm528, %v569
        %572 = vrot.lane.b32.xlu0 %v512, 106
        %v573 = vpop.permute.xlu0 %572
        %575 = vst.msk [vmem:[%s516 + $0x8] sm:$0xff] %vm533, %v573
        %576 = vrot.lane.b32.xlu0 %v512, 104
        %v577 = vpop.permute.xlu0 %576
        %579 = vst.msk [vmem:[%s516 + $0x8] sm:$0xff] %vm538, %v577
        %580 = vrot.lane.b32.xlu0 %v512, 102
        %v581 = vpop.permute.xlu0 %580
        %583 = vst.msk [vmem:[%s516 + $0x8] sm:$0xff] %vm543, %v581
        %585 = vrot.lane.b32.xlu0 %v512, 100
        %v586 = vpop.permute.xlu0 %585
        %587 = vrot.lane.b32.xlu0 %v513, 100
        %v588 = vpop.permute.xlu0 %587
        %vm589 = vcmask 818176
        %v590 = vsel %vm589, %v586, %v588
        %592 = vst.msk [vmem:[%s516 + $0x8] sm:$0xff] %vm548, %v590
        %593 = vrot.lane.b32.xlu0 %v513, 98
        %v594 = vpop.permute.xlu0 %593
        %596 = vst.msk [vmem:[%s516 + $0x8] sm:$0xff] %vm558, %v594
        %p597 = scmp.eq.s32.totalorder %s16, 1
        // Predicated region
        $region41: #{tpu_custom_call.1} parent=35 // pred_check
          %p598 = pneg %p597
        $region42: #{tpu_custom_call.1} parent=35 // pred_check_branch
          %600 = sbr.rel (%p598) target = $region44
        $region43: #{tpu_custom_call.1} parent=35 // pred_region
          %v601 = vld [vmem:[#allocation3] sm:$0xff]
          %v602 = vld [vmem:[#allocation3 + $0x8] sm:$0xff]
          %v603 = vld [vmem:[#allocation3 + $0x10] sm:$0xff]
          %v604 = vld [vmem:[#allocation3 + $0x18] sm:$0xff]
          %v605 = vadd.f32 %v601, %v602
          %606 = vadd.xlane.f32.xlu0 %v605
          %v607 = vpop.xlane.xlu0 %606
          %v608 = vadd.f32 %v603, %v604
          %609 = vadd.xlane.f32.xlu0 %v608
          %v610 = vpop.xlane.xlu0 %609
          %v611 = vadd.f32 %v607, %v610
          %v612 = vrcp.pop 512.0
          %v613 = vmul.f32 %v611, %v612
          %v614 = vsub.f32 %v601, %v613
          %v615 = vsub.f32 %v602, %v613
          %v616 = vsub.f32 %v603, %v613
          %v617 = vsub.f32 %v604, %v613
          %v618 = vmul.f32 %v614, %v614
          %v619 = vmul.f32 %v615, %v615
          %v620 = vmul.f32 %v616, %v616
          %v621 = vmul.f32 %v617, %v617
          %v622 = vadd.f32 %v618, %v619
          %623 = vadd.xlane.f32.xlu0 %v622
          %v624 = vpop.xlane.xlu0 %623
          %v625 = vadd.f32 %v620, %v621
          %626 = vadd.xlane.f32.xlu0 %v625
          %v627 = vpop.xlane.xlu0 %626
          %v628 = vadd.f32 %v624, %v627
          %v629 = vmul.f32 %v628, %v612
          %v630 = vadd.f32 %v629, 1e-05
          %v631 = vrsqrt.pop %v630
          %v632 = vld [vmem:[%s2] sm:$0xff]
          %v633 = vmul.f32 %v632, %v631
          %v634 = vld [vmem:[%s3] sm:$0xff]
          %v635 = vmul.f32 %v613, %v633
          %v636 = vsub.f32 %v634, %v635
          %638 = vset.pattern.permute.xlu0 0
          %639 = vperm.xlu0 %638, %v633
          %v640 = vpop.permute.xlu0 %639
          %v642 = vmul.f32 %v601, %v640
          %v643 = vmul.f32 %v602, %v640
          %v644 = vmul.f32 %v603, %v640
          %v645 = vmul.f32 %v604, %v640
          %647 = vset.pattern.permute.xlu0 0
          %648 = vperm.xlu0 %647, %v636
          %v649 = vpop.permute.xlu0 %648
          %v651 = vadd.f32 %v642, %v649
          %v652 = vadd.f32 %v643, %v649
          %v653 = vadd.f32 %v644, %v649
          %v654 = vadd.f32 %v645, %v649
          %655 = vst [vmem:[#allocation3] sm:$0xff] %v651
          %656 = vst [vmem:[#allocation3 + $0x8] sm:$0xff] %v652
          %657 = vst [vmem:[#allocation3 + $0x10] sm:$0xff] %v653
          %658 = vst [vmem:[#allocation3 + $0x18] sm:$0xff] %v654
        $region44: #{tpu_custom_call.1} parent=35 // pred_fallthru
          _
        // Predicated region
        $region45: #{tpu_custom_call.1} parent=35 // pred_check
          %p659 = pneg %p118
        $region46: #{tpu_custom_call.1} parent=35 // pred_check_branch
          %661 = sbr.rel (%p659) target = $region48
        $region47: #{tpu_custom_call.1} parent=35 // pred_region
          %s663 = ssub.s32 512, 512
          %664 = vsyncadd [#allocation4], %s663
          %s665 = sshll.u32 [#allocation3], 4
          %s666 = int_to_ptr.vmem [resolvable:$true] %s665
          %671 = dma.vmem_to_hbm [thread:$0]  %s666, 512, %s4, [#allocation4], 256, 256, 16
        $region48: #{tpu_custom_call.1} parent=35 // pred_fallthru
          _
        // Predicated region
        $region49: #{tpu_custom_call.1} parent=35 // pred_check
          %p672 = pneg %p118
        $region50: #{tpu_custom_call.1} parent=35 // pred_check_branch
          %674 = sbr.rel (%p672) target = $region52
        $region51: #{tpu_custom_call.1} parent=35 // pred_region
          %675 = dma.done [#allocation4], 512
        $region52: #{tpu_custom_call.1} parent=35 // pred_fallthru
          _
      $region36: #{tpu_custom_call.1} parent=5 // pred_fallthru
        _
      %p676 = scmp.le.s32.totalorder 2, %s11
      // Predicated region
      $region53: #{tpu_custom_call.1} parent=5 // pred_check
        %p677 = pneg %p676
      $region54: #{tpu_custom_call.1} parent=5 // pred_check_branch
        %679 = sbr.rel (%p677) target = $region56
      $region55: #{tpu_custom_call.1} parent=5 // pred_region
        %s680 = ssub.s32 %s11, 2
      $region56: #{tpu_custom_call.1} parent=5 // pred_fallthru
        _
    $region6: #{tpu_custom_call.1} parent=1 // loop_footer
      %s15 = sadd.s32 1, %s11
    $region7: #{tpu_custom_call.1} parent=1 // loop_footer_branch
      %10 = sbr.rel target = $region3
    $region8: #{tpu_custom_call.1} parent=1 // loop_exit
      _
    %681 = vsyncpa [#allocation4], 1
    %s682 = scalar_lea.sflag [#allocation4], 1
    %683 = vsyncpa %s682, 1

</llo_original>
